<compile_context>
chip_gen: v7x
topology: tpu7x:2x2x1
jax: 0.10.0
libtpu: 0.0.40
codegen_flags: <defaults>
</compile_context>

<pallas_src>
import functools
from types import SimpleNamespace

import numpy as np
import jax
import jax.numpy as jnp
from jax.experimental import pallas as pl
from jax.experimental.pallas import tpu as pltpu


def sigmoid_rampup(current, rampup_length):
    """Exponential rampup (host-side scalar math, same as the PyTorch ref)."""
    if rampup_length == 0:
        return 1.0
    current = np.clip(current, 0.0, rampup_length)
    phase = 1.0 - current / rampup_length
    return float(np.exp(-5.0 * phase * phase))


def _round_up(x, m):
    return ((x + m - 1) // m) * m


def _choose_tb(n_rows, c_pad, requested=None):
    """Pick a batch tile: big enough to amortize per-step overhead, small
    enough that double-buffered blocks fit comfortably in v7x's 64 MiB VMEM."""
    if requested is not None:
        tb = requested
    else:
        budget = 24 * 1024 * 1024               # resident-buffer budget (bytes)
        per_row = 8 * c_pad * 4                  # 4 (tb,Cpad) f32 blocks x 2 bufs
        tb = min(1024, max(8, budget // per_row), _round_up(n_rows, 8))
    tb = max(8, (tb // 8) * 8)
    return int(tb)


def _elr_plus_kernel(out_ref, y_ref, q_ref, ypred_ref, ce_ref, reg_ref):
    """Fused softmax + clamp + CE + ELR regularizer over one batch tile.

    Emits lane-dense per-tile partial sums (no cross-step accumulator), so the
    grid axis is fully parallel.
    """
    logits = out_ref[...].astype(jnp.float32)            # (tb, Cpad)
    y_lab = y_ref[...].astype(jnp.float32)               # (tb, Cpad)
    q = q_ref[...].astype(jnp.float32)                   # (tb, Cpad)

    # numerically-stable softmax / log-softmax along the class (lane) axis
    m = jnp.max(logits, axis=1, keepdims=True)
    shifted = logits - m
    exps = jnp.exp(shifted)
    denom = jnp.sum(exps, axis=1, keepdims=True)
    inv_denom = pl.reciprocal(denom, approx=False)        # per-row, EUP path
    softmax = exps * inv_denom
    log_softmax = shifted - jnp.log(denom)

    # y_pred = clamp(softmax, 1e-4, 1 - 1e-4)
    y_pred = jnp.clip(softmax, 1e-4, 1.0 - 1e-4)
    ypred_ref[...] = y_pred.astype(ypred_ref.dtype)

    # per-row cross-entropy with soft labels:  -sum(y * log_softmax, dim=-1)
    ce_rows = -jnp.sum(y_lab * log_softmax, axis=1, keepdims=True)       # (tb,1)
    # ELR regularizer inner term: log(1 - sum(q * y_pred, dim=1)), clamped
    inner = jnp.sum(q * y_pred, axis=1, keepdims=True)
    reg_rows = jnp.log(jnp.maximum(1.0 - inner, 1e-8))                   # (tb,1)

    ce_tile = jnp.sum(ce_rows)      # one sublane reduce per tile
    reg_tile = jnp.sum(reg_rows)
    # lane-dense (1,8,128) partial-sum slabs; wrapper reads [:,0,0]
    ce_ref[...] = jnp.full(ce_ref.shape, ce_tile, dtype=ce_ref.dtype)
    reg_ref[...] = jnp.full(reg_ref.shape, reg_tile, dtype=reg_ref.dtype)


def elr_plus_forward(iteration, output, y_labeled, q, *, coef_step, lbd, tb=None):
    """Pallas implementation of elr_plus_loss.forward (weight=None path).

    Returns (final_loss, y_pred) like the PyTorch module. Inputs may be f32 or
    bf16 (kernel upcasts internally; y_pred is written in the input dtype).
    """
    N, C = output.shape
    C_pad = _round_up(max(C, 128), 128)
    tb = _choose_tb(N, C_pad, tb)
    N_pad = _round_up(max(N, tb), tb)
    num_tiles = N_pad // tb

    # Pad class dim to a lane-dense multiple of 128 and rows to a multiple of
    # tb.  Padded logits = -1e30 (exp underflows to 0; finite so 0*logp == 0),
    # padded y_labeled / q = 0, so all reductions are unchanged and padded
    # rows contribute exactly 0 to both sums.
    logits_p = jnp.full((N_pad, C_pad), -1e30, dtype=output.dtype)
    logits_p = logits_p.at[:N, :C].set(output)
    y_p = jnp.zeros((N_pad, C_pad), dtype=y_labeled.dtype).at[:N, :C].set(y_labeled)
    q_p = jnp.zeros((N_pad, C_pad), dtype=q.dtype).at[:N, :C].set(q)

    itemsize = jnp.dtype(output.dtype).itemsize
    cost = pl.CostEstimate(
        flops=int(8 * N_pad * C_pad),
        transcendentals=int(N_pad * C_pad + 2 * N_pad),
        bytes_accessed=int(4 * N_pad * C_pad * itemsize),
    )

    y_pred_pad, ce_part, reg_part = pl.pallas_call(
        _elr_plus_kernel,
        out_shape=(
            jax.ShapeDtypeStruct((N_pad, C_pad), output.dtype),     # y_pred
            jax.ShapeDtypeStruct((num_tiles, 8, 128), jnp.float32), # CE partials
            jax.ShapeDtypeStruct((num_tiles, 8, 128), jnp.float32), # reg partials
        ),
        grid_spec=pltpu.PrefetchScalarGridSpec(
            num_scalar_prefetch=0,
            grid=(num_tiles,),
            in_specs=[
                pl.BlockSpec((tb, C_pad), lambda i: (i, 0)),
                pl.BlockSpec((tb, C_pad), lambda i: (i, 0)),
                pl.BlockSpec((tb, C_pad), lambda i: (i, 0)),
            ],
            out_specs=[
                pl.BlockSpec((tb, C_pad), lambda i: (i, 0)),
                pl.BlockSpec((1, 8, 128), lambda i: (i, 0, 0)),
                pl.BlockSpec((1, 8, 128), lambda i: (i, 0, 0)),
            ],
        ),
        compiler_params=pltpu.CompilerParams(
            dimension_semantics=("parallel",),
            vmem_limit_bytes=48 * 1024 * 1024),
        cost_estimate=cost,
    )(logits_p, y_p, q_p)

    # tiny epilogue: combine per-tile partial sums, take the batch mean
    ce = jnp.sum(ce_part[:, 0, 0]) / N
    reg = jnp.sum(reg_part[:, 0, 0]) / N

    # scalar glue (host-side, same as the PyTorch module's Python scalars)
    ramp = sigmoid_rampup(iteration, int(coef_step))
    final_loss = ce + ramp * (int(lbd) * reg)
    y_pred = y_pred_pad[:N, :C]
    return final_loss, y_pred

# TODO(synk): per-sample `weight` branch, the num_classes==100 label
#             renormalization branch, and the `.cpu().detach()` host transfer
#             are not exercised (defaults used).


def _reference(iteration, output, y_labeled, q, *, coef_step, lbd):
    """Pure-JAX reference mirroring the PyTorch forward."""
    y_pred = jax.nn.softmax(output, axis=1)
    y_pred = jnp.clip(y_pred, 1e-4, 1.0 - 1e-4)
    log_sm = jax.nn.log_softmax(output, axis=1)
    ce = jnp.mean(-jnp.sum(y_labeled * log_sm, axis=-1))
    reg = jnp.mean(jnp.log(1.0 - jnp.sum(q * y_pred, axis=1)))
    final = ce + sigmoid_rampup(iteration, int(coef_step)) * (int(lbd) * reg)
    return final, y_pred


def _run_case(key, N, C, iteration, config, beta, tb=None):
    k_out, k_lab, k_hist = jax.random.split(key, 3)
    output = jax.random.normal(k_out, (N, C), dtype=jnp.float32) * 2.0
    labels = jax.random.randint(k_lab, (N,), 0, C)
    y_labeled = jax.nn.one_hot(labels, C, dtype=jnp.float32)
    # Deterministically simulate one `update_hist` step so q is a meaningful
    # (N, C) target: pred_hist starts at zeros -> pred_hist = (1-beta)*softmax,
    # and with mixup_l = 1, q == pred_hist.
    prev_out = jax.random.normal(k_hist, (N, C), dtype=jnp.float32)
    q = (1.0 - beta) * jax.nn.softmax(prev_out, axis=1)

    loss, y_pred = elr_plus_forward(
        iteration, output, y_labeled, q,
        coef_step=config.coef_step, lbd=config.lbd, tb=tb)
    jax.block_until_ready((loss, y_pred))

    ref_loss, ref_pred = _reference(
        iteration, output, y_labeled, q,
        coef_step=config.coef_step, lbd=config.lbd)
    assert np.allclose(np.asarray(loss), np.asarray(ref_loss), atol=1e-5), \
        (loss, ref_loss)
    assert np.allclose(np.asarray(y_pred), np.asarray(ref_pred), atol=1e-5)


if __name__ == "__main__":
    config = SimpleNamespace(coef_step=4000, lbd=3)
    beta = 0.3
    iteration = 1000
    key = jax.random.PRNGKey(0)
    k1, k2 = jax.random.split(key)

    # small, forward-consistent shapes: batch=8, num_classes=10 (single tile)
    _run_case(k1, N=8, C=10, iteration=iteration, config=config, beta=beta)
    # multi-tile + row-padding path: batch=20, tb=8 -> 3 parallel grid steps
    _run_case(k2, N=20, C=10, iteration=iteration, config=config, beta=beta, tb=8)

    print("KERNEL_OK")
</pallas_src>

<mosaic_0001>
module attributes {stable_mosaic.version = 11 : i64} {
  func.func @_elr_plus_kernel(%arg0: i32, %arg1: memref<8x128xf32, #tpu.memory_space<vmem>>, %arg2: memref<8x128xf32, #tpu.memory_space<vmem>>, %arg3: memref<8x128xf32, #tpu.memory_space<vmem>>, %arg4: memref<8x128xf32, #tpu.memory_space<vmem>>, %arg5: memref<1x8x128xf32, #tpu.memory_space<vmem>>, %arg6: memref<1x8x128xf32, #tpu.memory_space<vmem>>) attributes {dimension_semantics = [#tpu.dimension_semantics<parallel>], iteration_bounds = array<i64: 1>, scalar_prefetch = 0 : i64, scratch_operands = 0 : i64, tpu.core_type = #tpu.core_type<tc>, window_params = [{transform_indices = @transform_0, window_bounds = array<i64: 8, 128>}, {transform_indices = @transform_1, window_bounds = array<i64: 8, 128>}, {transform_indices = @transform_2, window_bounds = array<i64: 8, 128>}, {transform_indices = @transform_3, window_bounds = array<i64: 8, 128>}, {transform_indices = @transform_4, window_bounds = array<i64: 1, 8, 128>}, {transform_indices = @transform_5, window_bounds = array<i64: 1, 8, 128>}]} {
    %c0 = arith.constant 0 : index
    %c0_0 = arith.constant 0 : index
    %0 = vector.load %arg1[%c0, %c0_0] : memref<8x128xf32, #tpu.memory_space<vmem>>, vector<8x128xf32>
    %c0_1 = arith.constant 0 : index
    %c0_2 = arith.constant 0 : index
    %1 = vector.load %arg2[%c0_1, %c0_2] : memref<8x128xf32, #tpu.memory_space<vmem>>, vector<8x128xf32>
    %c0_3 = arith.constant 0 : index
    %c0_4 = arith.constant 0 : index
    %2 = vector.load %arg3[%c0_3, %c0_4] : memref<8x128xf32, #tpu.memory_space<vmem>>, vector<8x128xf32>
    %cst = arith.constant dense<0xFF800000> : vector<8xf32>
    %3 = vector.multi_reduction <maximumf>, %0, %cst [1] : vector<8x128xf32> to vector<8xf32>
    %4 = vector.shape_cast %3 : vector<8xf32> to vector<8x1xf32>
    %5 = vector.broadcast %4 : vector<8x1xf32> to vector<8x128xf32>
    %6 = arith.subf %0, %5 : vector<8x128xf32>
    %7 = math.exp %6 : vector<8x128xf32>
    %cst_5 = arith.constant dense<0.000000e+00> : vector<8xf32>
    %8 = vector.multi_reduction <add>, %7, %cst_5 [1] : vector<8x128xf32> to vector<8xf32>
    %9 = vector.shape_cast %8 : vector<8xf32> to vector<8x1xf32>
    %10 = tpu.reciprocal %9 : vector<8x1xf32> -> vector<8x1xf32>
    %11 = vector.broadcast %10 : vector<8x1xf32> to vector<8x128xf32>
    %12 = arith.mulf %7, %11 : vector<8x128xf32>
    %13 = math.log %9 : vector<8x1xf32>
    %14 = vector.broadcast %13 : vector<8x1xf32> to vector<8x128xf32>
    %15 = arith.subf %6, %14 : vector<8x128xf32>
    %cst_6 = arith.constant 9.99999974E-5 : f32
    %cst_7 = arith.constant 0.999899983 : f32
    %16 = vector.broadcast %cst_6 : f32 to vector<8x128xf32>
    %17 = arith.maximumf %16, %12 : vector<8x128xf32>
    %18 = vector.broadcast %cst_7 : f32 to vector<8x128xf32>
    %19 = arith.minimumf %18, %17 : vector<8x128xf32>
    %c0_8 = arith.constant 0 : index
    %c0_9 = arith.constant 0 : index
    %20 = vector.load %arg4[%c0_8, %c0_9] : memref<8x128xf32, #tpu.memory_space<vmem>>, vector<8x128xf32>
    tpu.vector_store %arg4[%c0_8, %c0_9], %19 {strides = array<i32>} : memref<8x128xf32, #tpu.memory_space<vmem>>, vector<8x128xf32>,
    %21 = arith.mulf %1, %15 : vector<8x128xf32>
    %cst_10 = arith.constant dense<0.000000e+00> : vector<8xf32>
    %22 = vector.multi_reduction <add>, %21, %cst_10 [1] : vector<8x128xf32> to vector<8xf32>
    %23 = vector.shape_cast %22 : vector<8xf32> to vector<8x1xf32>
    %cst_11 = arith.constant 0.000000e+00 : f32
    %24 = vector.broadcast %cst_11 : f32 to vector<8x1xf32>
    %25 = arith.subf %24, %23 : vector<8x1xf32>
    %26 = arith.mulf %2, %19 : vector<8x128xf32>
    %cst_12 = arith.constant dense<0.000000e+00> : vector<8xf32>
    %27 = vector.multi_reduction <add>, %26, %cst_12 [1] : vector<8x128xf32> to vector<8xf32>
    %28 = vector.shape_cast %27 : vector<8xf32> to vector<8x1xf32>
    %cst_13 = arith.constant 1.000000e+00 : f32
    %29 = vector.broadcast %cst_13 : f32 to vector<8x1xf32>
    %30 = arith.subf %29, %28 : vector<8x1xf32>
    %cst_14 = arith.constant 9.99999993E-9 : f32
    %31 = vector.broadcast %cst_14 : f32 to vector<8x1xf32>
    %32 = arith.maximumf %30, %31 : vector<8x1xf32>
    %33 = math.log %32 : vector<8x1xf32>
    %34 = vector.shape_cast %25 : vector<8x1xf32> to vector<1x8x1xf32>
    %cst_15 = arith.constant dense<0.000000e+00> : vector<1xf32>
    %35 = vector.multi_reduction <add>, %34, %cst_15 [1, 2] : vector<1x8x1xf32> to vector<1xf32>
    %36 = vector.shape_cast %35 : vector<1xf32> to vector<1x1x1xf32>
    %37 = vector.extract %36[0, 0, 0] : f32 from vector<1x1x1xf32>
    %38 = vector.shape_cast %33 : vector<8x1xf32> to vector<1x8x1xf32>
    %cst_16 = arith.constant dense<0.000000e+00> : vector<1xf32>
    %39 = vector.multi_reduction <add>, %38, %cst_16 [1, 2] : vector<1x8x1xf32> to vector<1xf32>
    %40 = vector.shape_cast %39 : vector<1xf32> to vector<1x1x1xf32>
    %41 = vector.extract %40[0, 0, 0] : f32 from vector<1x1x1xf32>
    %42 = vector.broadcast %37 : f32 to vector<1x8x128xf32>
    %c0_17 = arith.constant 0 : index
    %c0_18 = arith.constant 0 : index
    %c0_19 = arith.constant 0 : index
    %43 = vector.load %arg5[%c0_17, %c0_18, %c0_19] : memref<1x8x128xf32, #tpu.memory_space<vmem>>, vector<1x8x128xf32>
    tpu.vector_store %arg5[%c0_17, %c0_18, %c0_19], %42 {strides = array<i32>} : memref<1x8x128xf32, #tpu.memory_space<vmem>>, vector<1x8x128xf32>,
    %44 = vector.broadcast %41 : f32 to vector<1x8x128xf32>
    %c0_20 = arith.constant 0 : index
    %c0_21 = arith.constant 0 : index
    %c0_22 = arith.constant 0 : index
    %45 = vector.load %arg6[%c0_20, %c0_21, %c0_22] : memref<1x8x128xf32, #tpu.memory_space<vmem>>, vector<1x8x128xf32>
    tpu.vector_store %arg6[%c0_20, %c0_21, %c0_22], %44 {strides = array<i32>} : memref<1x8x128xf32, #tpu.memory_space<vmem>>, vector<1x8x128xf32>,
    return
  }
  func.func @transform_0(%arg0: i32) -> (i32, i32) {
    %c0_i32 = arith.constant 0 : i32
    %c0_i32_0 = arith.constant 0 : i32
    return %arg0, %c0_i32 : i32, i32
  }
  func.func @transform_1(%arg0: i32) -> (i32, i32) {
    %c0_i32 = arith.constant 0 : i32
    %c0_i32_0 = arith.constant 0 : i32
    return %arg0, %c0_i32 : i32, i32
  }
  func.func @transform_2(%arg0: i32) -> (i32, i32) {
    %c0_i32 = arith.constant 0 : i32
    %c0_i32_0 = arith.constant 0 : i32
    return %arg0, %c0_i32 : i32, i32
  }
  func.func @transform_3(%arg0: i32) -> (i32, i32) {
    %c0_i32 = arith.constant 0 : i32
    %c0_i32_0 = arith.constant 0 : i32
    return %arg0, %c0_i32 : i32, i32
  }
  func.func @transform_4(%arg0: i32) -> (i32, i32, i32) {
    %c0_i32 = arith.constant 0 : i32
    %c0_i32_0 = arith.constant 0 : i32
    %c0_i32_1 = arith.constant 0 : i32
    return %arg0, %c0_i32, %c0_i32_0 : i32, i32, i32
  }
  func.func @transform_5(%arg0: i32) -> (i32, i32, i32) {
    %c0_i32 = arith.constant 0 : i32
    %c0_i32_0 = arith.constant 0 : i32
    %c0_i32_1 = arith.constant 0 : i32
    return %arg0, %c0_i32, %c0_i32_0 : i32, i32, i32
  }
}

</mosaic_0001>

<llo_original>
// kernel: tpu_custom_call.1
$region0: #{tpu_custom_call.1}
  #allocation0 [shape = 'u32[]', space=smem, size = 0x4, offset = 0x4, fixed_abs, tag = 'smem constant byte address 0x4 - core index']
  #allocation1 [shape = 'u32[144,128]{1,0:T(1,128)}', space=vmem, size = 0x12000, scoped, tag = 'internal scratch']
  %s0 = inlined_call_operand.hbm [shape: f32[8,128], index: 0, kind: input, shape index: {}]
  %s1 = inlined_call_operand.hbm [shape: f32[8,128], index: 1, kind: input, shape index: {}]
  %s2 = inlined_call_operand.hbm [shape: f32[8,128], index: 2, kind: input, shape index: {}]
  %s3 = inlined_call_operand.hbm [shape: f32[8,128], index: 3, kind: output, shape index: {0}]
  %s4 = inlined_call_operand.hbm [shape: f32[1,8,128], index: 4, kind: output, shape index: {1}]
  %s5 = inlined_call_operand.hbm [shape: f32[1,8,128], index: 5, kind: output, shape index: {2}]
  %6 = xla_tuple %s3, %s4, %s5
  %s7 = sld [smem:[#allocation0]]
  $region50: #{tpu_custom_call.1} parent=0
    _
  %s9 = ssub.s32 1, %s7
  %s10 = scalar_select 0, %s9, %s7
  $region1: #{tpu_custom_call.1} parent=0
    #allocation2 [shape = 'u8[4096]{0}', space=vmem, size = 0x1000, scoped, tag = 'input window, operand 0, single buffered']
    #allocation3 [shape = 's32[1]{0}', space=sflag, size = 0x4, scoped, tag = 'scoped memory for tpu_custom_call.1']
    #allocation4 [shape = 's32[1]{0}', space=sflag, size = 0x4, scoped, tag = 'scoped memory for tpu_custom_call.1']
    #allocation5 [shape = 'u8[4096]{0}', space=vmem, size = 0x1000, scoped, tag = 'input window, operand 1, single buffered']
    #allocation6 [shape = 's32[1]{0}', space=sflag, size = 0x4, scoped, tag = 'scoped memory for tpu_custom_call.1']
    #allocation7 [shape = 'u8[4096]{0}', space=vmem, size = 0x1000, scoped, tag = 'input window, operand 2, single buffered']
    #allocation8 [shape = 'u8[4096]{0}', space=vmem, size = 0x1000, scoped, tag = 'output window, operand 0, single buffered']
    #allocation9 [shape = 'u8[4096]{0}', space=vmem, size = 0x1000, scoped, tag = 'output window, operand 1, single buffered']
    #allocation10 [shape = 's32[1]{0}', space=sflag, size = 0x4, scoped, tag = 'scoped memory for tpu_custom_call.1']
    #allocation11 [shape = 'u8[4096]{0}', space=vmem, size = 0x1000, scoped, tag = 'output window, operand 2, single buffered']
    %11 = vsyncpa [#allocation3], 0
    %12 = vsyncpa [#allocation6], 0
    %13 = vsyncpa [#allocation4], 0
    %14 = vsyncpa [#allocation10], 0
    // Predicated region
    $region2: #{tpu_custom_call.1} parent=1 // pred_check
      _
    $region3: #{tpu_custom_call.1} parent=1 // pred_check_branch
      %16 = sbr.rel (0) target = $region5
    $region4: #{tpu_custom_call.1} parent=1 // pred_region
      %s18 = ssub.s32 128, 128
      %19 = vsyncadd [#allocation3], %s18
      %s21 = sshll.u32 [#allocation2], 4
      %s22 = int_to_ptr.vmem [resolvable:$true] %s21
      %24 = dma.hbm_to_vmem [thread:$0]  %s0, 128, %s22, [#allocation3]
    $region5: #{tpu_custom_call.1} parent=1 // pred_fallthru
      _
    // Predicated region
    $region6: #{tpu_custom_call.1} parent=1 // pred_check
      _
    $region7: #{tpu_custom_call.1} parent=1 // pred_check_branch
      %26 = sbr.rel (0) target = $region9
    $region8: #{tpu_custom_call.1} parent=1 // pred_region
      %s28 = ssub.s32 128, 128
      %29 = vsyncadd [#allocation6], %s28
      %s31 = sshll.u32 [#allocation5], 4
      %s32 = int_to_ptr.vmem [resolvable:$true] %s31
      %34 = dma.hbm_to_vmem [thread:$0]  %s1, 128, %s32, [#allocation6]
    $region9: #{tpu_custom_call.1} parent=1 // pred_fallthru
      _
    // Predicated region
    $region10: #{tpu_custom_call.1} parent=1 // pred_check
      _
    $region11: #{tpu_custom_call.1} parent=1 // pred_check_branch
      %36 = sbr.rel (0) target = $region13
    $region12: #{tpu_custom_call.1} parent=1 // pred_region
      %s38 = ssub.s32 128, 128
      %39 = vsyncadd [#allocation6], %s38
      %s41 = sshll.u32 [#allocation7], 4
      %s42 = int_to_ptr.vmem [resolvable:$true] %s41
      %44 = dma.hbm_to_vmem [thread:$0]  %s2, 128, %s42, [#allocation6]
    $region13: #{tpu_custom_call.1} parent=1 // pred_fallthru
      _
    // Predicated region
    $region14: #{tpu_custom_call.1} parent=1 // pred_check
      _
    $region15: #{tpu_custom_call.1} parent=1 // pred_check_branch
      %46 = sbr.rel (0) target = $region17
    $region16: #{tpu_custom_call.1} parent=1 // pred_region
      %47 = dma.done [#allocation3], 128
    $region17: #{tpu_custom_call.1} parent=1 // pred_fallthru
      _
    // Predicated region
    $region18: #{tpu_custom_call.1} parent=1 // pred_check
      _
    $region19: #{tpu_custom_call.1} parent=1 // pred_check_branch
      %49 = sbr.rel (0) target = $region21
    $region20: #{tpu_custom_call.1} parent=1 // pred_region
      %50 = dma.done [#allocation6], 128
    $region21: #{tpu_custom_call.1} parent=1 // pred_fallthru
      _
    // Predicated region
    $region22: #{tpu_custom_call.1} parent=1 // pred_check
      _
    $region23: #{tpu_custom_call.1} parent=1 // pred_check_branch
      %52 = sbr.rel (0) target = $region25
    $region24: #{tpu_custom_call.1} parent=1 // pred_region
      %53 = dma.done [#allocation6], 128
    $region25: #{tpu_custom_call.1} parent=1 // pred_fallthru
      _
    %v54 = vld [vmem:[#allocation2] sm:$0xff]
    %v55 = vld [vmem:[#allocation5] sm:$0xff]
    %v56 = vld [vmem:[#allocation7] sm:$0xff]
    %57 = vmax.xlane.f32.xlu0 %v54
    %v58 = vpop.xlane.xlu0 %57
    %v59 = vsub.f32 %v54, %v58
    %v60 = vmul.f32 %v59, 1.442695
    %v61 = vpow.pop %v60
    %62 = vadd.xlane.f32.xlu0 %v61
    %v63 = vpop.xlane.xlu0 %62
    %v64 = vrcp.pop %v63
    %v65 = vmul.f32 %v61, %v64
    %v66 = vlog2.pop %v63
    %v67 = vmul.f32 %v66, 0.6931472
    %v68 = vsub.f32 %v59, %v67
    %v69 = vmax.f32 %v65, 0.0001
    %v70 = vmin.f32 %v69, 0.9999
    %71 = vst [vmem:[#allocation8] sm:$0xff] %v70
    %v72 = vmul.f32 %v55, %v68
    %73 = vadd.xlane.f32.xlu0 %v72
    %v74 = vpop.xlane.xlu0 %73
    %v75 = vsub.f32 0.0, %v74
    %v76 = vmul.f32 %v56, %v70
    %77 = vadd.xlane.f32.xlu0 %v76
    %v78 = vpop.xlane.xlu0 %77
    %v79 = vsub.f32 1.0, %v78
    %v80 = vmax.f32 %v79, 1e-08
    %v81 = vlog2.pop %v80
    %v82 = vmul.f32 %v81, 0.6931472
    %vm83 = vcmask 7168
    %v84 = vsel %vm83, %v75, 0.0
    %85 = vadd.xlane.f32.xlu0 %v84
    %v86 = vpop.xlane.xlu0 %85
    %v87 = vrot.slane %v86, 4
    %v88 = vadd.f32 %v86, %v87
    %v89 = vrot.slane %v88, 2
    %v90 = vadd.f32 %v88, %v89
    %v91 = vrot.slane %v90, 1
    %v92 = vadd.f32 %v90, %v91
    %s93 = vtos %v92
    %v94 = vsel %vm83, %v82, 0.0
    %95 = vadd.xlane.f32.xlu0 %v94
    %v96 = vpop.xlane.xlu0 %95
    %v97 = vrot.slane %v96, 4
    %v98 = vadd.f32 %v96, %v97
    %v99 = vrot.slane %v98, 2
    %v100 = vadd.f32 %v98, %v99
    %v101 = vrot.slane %v100, 1
    %v102 = vadd.f32 %v100, %v101
    %s103 = vtos %v102
    %v104 = vstv %s93
    %105 = vst [vmem:[#allocation9] sm:$0xff] %v104
    %v106 = vstv %s103
    %107 = vst [vmem:[#allocation11] sm:$0xff] %v106
    // Predicated region
    $region26: #{tpu_custom_call.1} parent=1 // pred_check
      _
    $region27: #{tpu_custom_call.1} parent=1 // pred_check_branch
      %109 = sbr.rel (0) target = $region29
    $region28: #{tpu_custom_call.1} parent=1 // pred_region
      %s111 = ssub.s32 128, 128
      %112 = vsyncadd [#allocation4], %s111
      %s114 = sshll.u32 [#allocation8], 4
      %s115 = int_to_ptr.vmem [resolvable:$true] %s114
      %117 = dma.vmem_to_hbm [thread:$0]  %s115, 128, %s3, [#allocation4]
    $region29: #{tpu_custom_call.1} parent=1 // pred_fallthru
      _
    // Predicated region
    $region30: #{tpu_custom_call.1} parent=1 // pred_check
      _
    $region31: #{tpu_custom_call.1} parent=1 // pred_check_branch
      %119 = sbr.rel (0) target = $region33
    $region32: #{tpu_custom_call.1} parent=1 // pred_region
      %s121 = ssub.s32 128, 128
      %122 = vsyncadd [#allocation10], %s121
      %s124 = sshll.u32 [#allocation9], 4
      %s125 = int_to_ptr.vmem [resolvable:$true] %s124
      %127 = dma.vmem_to_hbm [thread:$0]  %s125, 128, %s4, [#allocation10]
    $region33: #{tpu_custom_call.1} parent=1 // pred_fallthru
      _
    // Predicated region
    $region34: #{tpu_custom_call.1} parent=1 // pred_check
      _
    $region35: #{tpu_custom_call.1} parent=1 // pred_check_branch
      %129 = sbr.rel (0) target = $region37
    $region36: #{tpu_custom_call.1} parent=1 // pred_region
      %s131 = ssub.s32 128, 128
      %132 = vsyncadd [#allocation10], %s131
      %s134 = sshll.u32 [#allocation11], 4
      %s135 = int_to_ptr.vmem [resolvable:$true] %s134
      %137 = dma.vmem_to_hbm [thread:$0]  %s135, 128, %s5, [#allocation10]
    $region37: #{tpu_custom_call.1} parent=1 // pred_fallthru
      _
    // Predicated region
    $region38: #{tpu_custom_call.1} parent=1 // pred_check
      _
    $region39: #{tpu_custom_call.1} parent=1 // pred_check_branch
      %139 = sbr.rel (0) target = $region41
    $region40: #{tpu_custom_call.1} parent=1 // pred_region
      %140 = dma.done [#allocation4], 128
    $region41: #{tpu_custom_call.1} parent=1 // pred_fallthru
      _
    // Predicated region
    $region42: #{tpu_custom_call.1} parent=1 // pred_check
      _
    $region43: #{tpu_custom_call.1} parent=1 // pred_check_branch
      %142 = sbr.rel (0) target = $region45
    $region44: #{tpu_custom_call.1} parent=1 // pred_region
      %143 = dma.done [#allocation10], 128
    $region45: #{tpu_custom_call.1} parent=1 // pred_fallthru
      _
    // Predicated region
    $region46: #{tpu_custom_call.1} parent=1 // pred_check
      _
    $region47: #{tpu_custom_call.1} parent=1 // pred_check_branch
      %145 = sbr.rel (0) target = $region49
    $region48: #{tpu_custom_call.1} parent=1 // pred_region
      %146 = dma.done [#allocation10], 128
    $region49: #{tpu_custom_call.1} parent=1 // pred_fallthru
      _
    %147 = vsyncpa [#allocation3], 1
    %148 = vsyncpa [#allocation6], 1
    %149 = vsyncpa [#allocation4], 1
    %150 = vsyncpa [#allocation10], 1

</llo_original>
